<compile_context>
chip_gen: v7x
topology: tpu7x:2x2x1
jax: 0.10.0
libtpu: 0.0.40
codegen_flags: <defaults>
</compile_context>

<pallas_src>
import functools

import jax
import jax.numpy as jnp
from jax.experimental import pallas as pl
from jax.experimental.pallas import tpu as pltpu

LANE = 128
VMEM_LIMIT_BYTES = 40 << 20  # < v7x's 64 MiB physical, > v5e's 16 MiB default


def _round_up(x, m):
    return -(-x // m) * m


def _sublane_multiple(dtype):
    # Native sublane tile: 8 (4-byte), 16 (2-byte), 32 (1-byte).
    return max(8, 32 // jnp.dtype(dtype).itemsize)


def _chip_plan():
    """(n_outer, stream_buffer_bytes) chosen from the local TPU generation."""
    kind = ""
    try:
        kind = jax.devices()[0].device_kind.lower()
    except Exception:
        pass
    if "7" in kind or "v4" in kind:   # megacore parts: 2 TCs behind one device
        return 2, 4 << 20             # 4 MiB per stream buffer
    return 1, 2 << 20                 # single TC (v5e / v6e): 2 MiB per buffer


def _split_slab(x):
    """(slab, tail): slab is a pure (rows, 128) reshape of the 128-aligned
    prefix (no HBM copy); tail is the <=127-element remainder."""
    flat = x.reshape(-1)
    n = flat.shape[0]
    rem = n % LANE
    main = flat[:n - rem].reshape(-1, LANE)
    return main, flat[n - rem:]


def _grid_plan(rows, sub, max_tile, n_outer_pref):
    """(n_outer, inner_blocks, tile_r) with tile_r % sub == 0 and every block
    index touching at least one real row (no fully-OOB blocks)."""
    max_tile = max(sub, (max_tile // sub) * sub)
    for n_outer in ((n_outer_pref, 1) if n_outer_pref > 1 else (1,)):
        n_blocks = n_outer * max(1, -(-rows // (n_outer * max_tile)))
        tile_r = min(_round_up(-(-rows // n_blocks), sub), _round_up(rows, sub))
        if (n_blocks - 1) * tile_r < rows:  # last block touches real rows
            return n_outer, n_blocks // n_outer, tile_r
    raise AssertionError("unreachable: n_outer == 1 always satisfies the check")


def _genloss_kernel(fake_ref, out_ref, tgt_ref, partial_ref, acc_ref, *,
                    tile_r, inner_blocks, n_outer, has_tail, tail_rows,
                    inv_n_fake, inv_n_img, l):
    o = pl.program_id(0)   # outer slice ("parallel"; megacore shard on v7x)
    i = pl.program_id(1)   # streaming / reduction axis ("arbitrary")

    @pl.when(i == 0)
    def _init():
        acc_ref[...] = jnp.zeros_like(acc_ref)

    def _accumulate(masked):
        diff = jnp.abs(tgt_ref[...].astype(jnp.float32)
                       - out_ref[...].astype(jnp.float32))
        if masked:
            # Tile-local row ids compared against the valid-row count of the
            # single (globally last) partial block.  Select (not arithmetic
            # masking) so OOB garbage cannot leak into the sum.
            row_ids = jax.lax.broadcasted_iota(jnp.int32, (tile_r, LANE), 0)
            diff = jnp.where(row_ids < tail_rows, diff, 0.0)
        # Fold into a vreg-shaped accumulator: cheap VPU adds per step, one
        # cross-lane reduce deferred to finalize.
        acc_ref[...] += jnp.sum(diff.reshape(tile_r // 8, 8, LANE), axis=0)

    if has_tail:
        is_tail = (o == n_outer - 1) & (i == inner_blocks - 1)

        @pl.when(jnp.logical_not(is_tail))
        def _full_tile():
            _accumulate(masked=False)

        @pl.when(is_tail)
        def _partial_tile():
            _accumulate(masked=True)
    else:
        # No partial block exists: unmasked fast path on every tile.
        _accumulate(masked=False)

    @pl.when(i == inner_blocks - 1)
    def _finalize():
        # Perceptual (L1) partial for this outer slice: one cross-lane reduce.
        partial_ref[0, 0] = l * (jnp.sum(acc_ref[...]) * inv_n_img)

    # Adversarial LSGAN generator term: tiny resident block, reduced exactly
    # once (outer slice 0, last inner step) -- gated with pl.when.
    adv_gate = i == inner_blocks - 1
    if n_outer > 1:
        adv_gate = adv_gate & (o == 0)

    @pl.when(adv_gate)
    def _adversarial():
        fp = fake_ref[...].astype(jnp.float32)
        adv = jnp.sum((fp - 1.0) * (fp - 1.0)) * inv_n_fake
        partial_ref[0, 0] = partial_ref[0, 0] + adv


def gen_loss_pallas(fake_pred, output, target, l=10.0, *, max_tile_rows=None):
    """GenLoss forward.  fake_pred: (N,1,H,W); output/target: (N,C,H,W)."""
    assert output.shape == target.shape
    n_img = output.size
    n_fake = fake_pred.size

    out2d, out_tail = _split_slab(output)      # pure views, no HBM copy
    tgt2d, tgt_tail = _split_slab(target)
    fake2d, fake_tail = _split_slab(fake_pred)

    sub = _sublane_multiple(output.dtype)
    n_outer_pref, buf_bytes = _chip_plan()
    if max_tile_rows is None:
        max_tile_rows = buf_bytes // (LANE * jnp.dtype(output.dtype).itemsize)

    # Degenerate guards (inputs smaller than one sublane tile): pad with
    # neutral rows (|0-0| = 0, (1-1)^2 = 0).  Touches < 4 KiB, never the
    # full tensors.
    if out2d.shape[0] < sub:
        pad = sub - out2d.shape[0]
        out2d = jnp.concatenate(
            [out2d, jnp.zeros((pad, LANE), out2d.dtype)], axis=0)
        tgt2d = jnp.concatenate(
            [tgt2d, jnp.zeros((pad, LANE), tgt2d.dtype)], axis=0)
    if fake2d.shape[0] == 0:
        fake2d = jnp.ones((8, LANE), fake2d.dtype)

    rows_img = out2d.shape[0]
    rows_fake = fake2d.shape[0]
    n_outer, inner_blocks, tile_r = _grid_plan(
        rows_img, sub, max_tile_rows, n_outer_pref)
    total_blocks = n_outer * inner_blocks
    has_tail = total_blocks * tile_r != rows_img
    tail_rows = rows_img - (total_blocks - 1) * tile_r

    kernel = functools.partial(
        _genloss_kernel,
        tile_r=tile_r, inner_blocks=inner_blocks, n_outer=n_outer,
        has_tail=has_tail, tail_rows=tail_rows,
        inv_n_fake=1.0 / n_fake, inv_n_img=1.0 / n_img, l=float(l))

    img_spec = pl.BlockSpec(
        (tile_r, LANE), lambda o, i: (o * inner_blocks + i, 0))

    img_itemsize = jnp.dtype(output.dtype).itemsize
    partials = pl.pallas_call(
        kernel,
        out_shape=jax.ShapeDtypeStruct((n_outer, 1), jnp.float32),
        grid=(n_outer, inner_blocks),
        in_specs=[
            # fake_pred is tiny: keep it resident (constant block index).
            pl.BlockSpec((rows_fake, LANE), lambda o, i: (0, 0)),
            img_spec,   # generator output (streamed)
            img_spec,   # target           (streamed)
        ],
        out_specs=pl.BlockSpec((1, 1), lambda o, i: (o, 0),
                               memory_space=pltpu.MemorySpace.SMEM),
        scratch_shapes=[pltpu.VMEM((8, LANE), jnp.float32)],
        compiler_params=pltpu.CompilerParams(
            dimension_semantics=("parallel", "arbitrary"),
            vmem_limit_bytes=VMEM_LIMIT_BYTES),
        cost_estimate=pl.CostEstimate(
            flops=int(3 * n_img + 3 * n_fake),
            transcendentals=0,
            bytes_accessed=int(2 * n_img * img_itemsize
                               + n_fake * jnp.dtype(fake_pred.dtype).itemsize
                               + 4 * n_outer)),
    )(fake2d, out2d, tgt2d)

    loss = jnp.sum(partials)   # at most 2 partials (one per TC slice)

    # Fold the <128-element slab remainders (if any): O(100) flops host-side
    # instead of re-writing the full tensors through HBM just to pad them.
    if out_tail.shape[0]:
        loss = loss + l * (jnp.sum(jnp.abs(tgt_tail.astype(jnp.float32)
                                           - out_tail.astype(jnp.float32)))
                           / n_img)
    if fake_tail.shape[0]:
        fp = fake_tail.astype(jnp.float32)
        loss = loss + jnp.sum((fp - 1.0) * (fp - 1.0)) / n_fake
    return loss


def gen_loss_ref(fake_pred, output, target, l=10.0):
    adv = jnp.mean((fake_pred.astype(jnp.float32) - 1.0) ** 2)
    perc = jnp.mean(
        jnp.abs(target.astype(jnp.float32) - output.astype(jnp.float32)))
    return adv + l * perc


if __name__ == "__main__":
    key = jax.random.PRNGKey(0)
    ks = jax.random.split(key, 10)
    l = 10.0

    # Config 1: 128-aligned sizes, default (large) tiles, unmasked fast path.
    fake_pred = jax.random.normal(ks[0], (2, 1, 16, 16), dtype=jnp.float32)
    output = jax.random.normal(ks[1], (2, 4, 16, 16), dtype=jnp.float32)
    target = jax.random.normal(ks[2], (2, 4, 16, 16), dtype=jnp.float32)
    loss = jax.block_until_ready(gen_loss_pallas(fake_pred, output, target, l))
    ref = gen_loss_ref(fake_pred, output, target, l)
    assert jnp.allclose(loss, ref, rtol=1e-5, atol=1e-5), (loss, ref)

    # Config 2: forced tiny tiles -> multi-step streaming reduction with a
    # masked partial tail block (30 rows, 8-row tiles).
    output2 = jax.random.normal(ks[3], (2, 3, 40, 16), dtype=jnp.float32)
    target2 = jax.random.normal(ks[4], (2, 3, 40, 16), dtype=jnp.float32)
    loss2 = jax.block_until_ready(
        gen_loss_pallas(fake_pred, output2, target2, l, max_tile_rows=8))
    ref2 = gen_loss_ref(fake_pred, output2, target2, l)
    assert jnp.allclose(loss2, ref2, rtol=1e-5, atol=1e-5), (loss2, ref2)

    # Config 3: numel % 128 != 0 (image tail) and fake_pred smaller than one
    # lane row -> exercises the view-only slab split + host-side tail fold.
    fake_pred3 = jax.random.normal(ks[5], (2, 1, 7, 9), dtype=jnp.float32)
    output3 = jax.random.normal(ks[6], (2, 3, 16, 17), dtype=jnp.float32)
    target3 = jax.random.normal(ks[7], (2, 3, 16, 17), dtype=jnp.float32)
    loss3 = jax.block_until_ready(
        gen_loss_pallas(fake_pred3, output3, target3, l, max_tile_rows=8))
    ref3 = gen_loss_ref(fake_pred3, output3, target3, l)
    assert jnp.allclose(loss3, ref3, rtol=1e-5, atol=1e-5), (loss3, ref3)

    # Config 4: bf16 images -> dtype-dependent (16,128) sublane tiling.
    output4 = jax.random.normal(ks[8], (2, 3, 32, 16), dtype=jnp.bfloat16)
    target4 = jax.random.normal(ks[9], (2, 3, 32, 16), dtype=jnp.bfloat16)
    loss4 = jax.block_until_ready(
        gen_loss_pallas(fake_pred, output4, target4, l, max_tile_rows=16))
    ref4 = gen_loss_ref(fake_pred, output4, target4, l)
    assert jnp.allclose(loss4, ref4, rtol=1e-4, atol=1e-4), (loss4, ref4)

    print("KERNEL_OK")
</pallas_src>

<mosaic_0001>
module attributes {stable_mosaic.version = 11 : i64} {
  func.func @_genloss_kernel(%arg0: i32, %arg1: i32, %arg2: memref<4x128xf32, #tpu.memory_space<vmem>>, %arg3: memref<16x128xf32, #tpu.memory_space<vmem>>, %arg4: memref<16x128xf32, #tpu.memory_space<vmem>>, %arg5: memref<1x1xf32, #tpu.memory_space<smem>>, %arg6: memref<8x128xf32, #tpu.memory_space<vmem>>) attributes {dimension_semantics = [#tpu.dimension_semantics<parallel>, #tpu.dimension_semantics<arbitrary>], iteration_bounds = array<i64: 1, 1>, scalar_prefetch = 0 : i64, scratch_operands = 1 : i64, tpu.core_type = #tpu.core_type<tc>, window_params = [{pipeline_mode = #tpu.pipeline_mode<synchronous>, transform_indices = @transform_0, window_bounds = array<i64: 4, 128>}, {transform_indices = @transform_1, window_bounds = array<i64: 16, 128>}, {transform_indices = @transform_2, window_bounds = array<i64: 16, 128>}, {transform_indices = @transform_3, window_bounds = array<i64: 1, 1>}]} {
    %c0_i32 = arith.constant 0 : i32
    %0 = arith.cmpi eq, %arg1, %c0_i32 : i32
    %1 = arith.extui %0 : i1 to i32
    %c0_i32_0 = arith.constant 0 : i32
    %2 = arith.cmpi ne, %1, %c0_i32_0 : i32
    scf.if %2 {
      %cst_12 = arith.constant 0.000000e+00 : f32
      %18 = vector.broadcast %cst_12 : f32 to vector<8x128xf32>
      %c0_13 = arith.constant 0 : index
      %c0_14 = arith.constant 0 : index
      %19 = vector.load %arg6[%c0_13, %c0_14] : memref<8x128xf32, #tpu.memory_space<vmem>>, vector<8x128xf32>
      tpu.vector_store %arg6[%c0_13, %c0_14], %18 {strides = array<i32>} : memref<8x128xf32, #tpu.memory_space<vmem>>, vector<8x128xf32>,
    } else {
    }
    %c0 = arith.constant 0 : index
    %c0_1 = arith.constant 0 : index
    %3 = vector.load %arg4[%c0, %c0_1] : memref<16x128xf32, #tpu.memory_space<vmem>>, vector<16x128xf32>
    %c0_2 = arith.constant 0 : index
    %c0_3 = arith.constant 0 : index
    %4 = vector.load %arg3[%c0_2, %c0_3] : memref<16x128xf32, #tpu.memory_space<vmem>>, vector<16x128xf32>
    %5 = arith.subf %3, %4 : vector<16x128xf32>
    %6 = math.absf %5 : vector<16x128xf32>
    %c0_4 = arith.constant 0 : index
    %c0_5 = arith.constant 0 : index
    %7 = vector.load %arg6[%c0_4, %c0_5] : memref<8x128xf32, #tpu.memory_space<vmem>>, vector<8x128xf32>
    %8 = vector.shape_cast %6 : vector<16x128xf32> to vector<2x8x128xf32>
    %cst = arith.constant dense<0.000000e+00> : vector<8x128xf32>
    %9 = vector.multi_reduction <add>, %8, %cst [0] : vector<2x8x128xf32> to vector<8x128xf32>
    %10 = arith.addf %7, %9 : vector<8x128xf32>
    %c0_6 = arith.constant 0 : index
    %c0_7 = arith.constant 0 : index
    %11 = vector.load %arg6[%c0_6, %c0_7] : memref<8x128xf32, #tpu.memory_space<vmem>>, vector<8x128xf32>
    tpu.vector_store %arg6[%c0_6, %c0_7], %10 {strides = array<i32>} : memref<8x128xf32, #tpu.memory_space<vmem>>, vector<8x128xf32>,
    %c0_i32_8 = arith.constant 0 : i32
    %12 = arith.cmpi eq, %arg1, %c0_i32_8 : i32
    %13 = arith.extui %12 : i1 to i32
    %c0_i32_9 = arith.constant 0 : i32
    %14 = arith.cmpi ne, %13, %c0_i32_9 : i32
    scf.if %14 {
      %c0_12 = arith.constant 0 : index
      %c0_13 = arith.constant 0 : index
      %18 = vector.load %arg6[%c0_12, %c0_13] : memref<8x128xf32, #tpu.memory_space<vmem>>, vector<8x128xf32>
      %19 = vector.shape_cast %18 : vector<8x128xf32> to vector<1x8x128xf32>
      %cst_14 = arith.constant dense<0.000000e+00> : vector<1xf32>
      %20 = vector.multi_reduction <add>, %19, %cst_14 [1, 2] : vector<1x8x128xf32> to vector<1xf32>
      %21 = vector.shape_cast %20 : vector<1xf32> to vector<1x1x1xf32>
      %22 = vector.extract %21[0, 0, 0] : f32 from vector<1x1x1xf32>
      %cst_15 = arith.constant 4.8828125E-4 : f32
      %23 = arith.mulf %22, %cst_15 : f32
      %cst_16 = arith.constant 1.000000e+01 : f32
      %24 = arith.mulf %cst_16, %23 : f32
      %c0_17 = arith.constant 0 : index
      %c0_18 = arith.constant 0 : index
      %25 = memref.load %arg5[%c0_17, %c0_18] : memref<1x1xf32, #tpu.memory_space<smem>>
      memref.store %24, %arg5[%c0_17, %c0_18] : memref<1x1xf32, #tpu.memory_space<smem>>
    } else {
    }
    %c0_i32_10 = arith.constant 0 : i32
    %15 = arith.cmpi eq, %arg1, %c0_i32_10 : i32
    %16 = arith.extui %15 : i1 to i32
    %c0_i32_11 = arith.constant 0 : i32
    %17 = arith.cmpi ne, %16, %c0_i32_11 : i32
    scf.if %17 {
      %c0_12 = arith.constant 0 : index
      %c0_13 = arith.constant 0 : index
      %18 = vector.load %arg2[%c0_12, %c0_13] : memref<4x128xf32, #tpu.memory_space<vmem>>, vector<4x128xf32>
      %cst_14 = arith.constant 1.000000e+00 : f32
      %19 = vector.broadcast %cst_14 : f32 to vector<4x128xf32>
      %20 = arith.subf %18, %19 : vector<4x128xf32>
      %cst_15 = arith.constant 1.000000e+00 : f32
      %21 = vector.broadcast %cst_15 : f32 to vector<4x128xf32>
      %22 = arith.subf %18, %21 : vector<4x128xf32>
      %23 = arith.mulf %20, %22 : vector<4x128xf32>
      %24 = vector.shape_cast %23 : vector<4x128xf32> to vector<1x4x128xf32>
      %cst_16 = arith.constant dense<0.000000e+00> : vector<1xf32>
      %25 = vector.multi_reduction <add>, %24, %cst_16 [1, 2] : vector<1x4x128xf32> to vector<1xf32>
      %26 = vector.shape_cast %25 : vector<1xf32> to vector<1x1x1xf32>
      %27 = vector.extract %26[0, 0, 0] : f32 from vector<1x1x1xf32>
      %cst_17 = arith.constant 0.001953125 : f32
      %28 = arith.mulf %27, %cst_17 : f32
      %c0_18 = arith.constant 0 : index
      %c0_19 = arith.constant 0 : index
      %29 = memref.load %arg5[%c0_18, %c0_19] : memref<1x1xf32, #tpu.memory_space<smem>>
      %30 = arith.addf %29, %28 : f32
      %c0_20 = arith.constant 0 : index
      %c0_21 = arith.constant 0 : index
      %31 = memref.load %arg5[%c0_20, %c0_21] : memref<1x1xf32, #tpu.memory_space<smem>>
      memref.store %30, %arg5[%c0_20, %c0_21] : memref<1x1xf32, #tpu.memory_space<smem>>
    } else {
    }
    return
  }
  func.func @transform_0(%arg0: i32, %arg1: i32) -> (i32, i32) {
    %c0_i32 = arith.constant 0 : i32
    %c0_i32_0 = arith.constant 0 : i32
    %c0_i32_1 = arith.constant 0 : i32
    return %c0_i32, %c0_i32_0 : i32, i32
  }
  func.func @transform_1(%arg0: i32, %arg1: i32) -> (i32, i32) {
    %c1_i32 = arith.constant 1 : i32
    %0 = arith.muli %arg0, %c1_i32 : i32
    %1 = arith.addi %0, %arg1 : i32
    %c0_i32 = arith.constant 0 : i32
    %c0_i32_0 = arith.constant 0 : i32
    return %1, %c0_i32 : i32, i32
  }
  func.func @transform_2(%arg0: i32, %arg1: i32) -> (i32, i32) {
    %c1_i32 = arith.constant 1 : i32
    %0 = arith.muli %arg0, %c1_i32 : i32
    %1 = arith.addi %0, %arg1 : i32
    %c0_i32 = arith.constant 0 : i32
    %c0_i32_0 = arith.constant 0 : i32
    return %1, %c0_i32 : i32, i32
  }
  func.func @transform_3(%arg0: i32, %arg1: i32) -> (i32, i32) {
    %c0_i32 = arith.constant 0 : i32
    %c0_i32_0 = arith.constant 0 : i32
    return %arg0, %c0_i32 : i32, i32
  }
}

</mosaic_0001>

<llo_original>
// kernel: tpu_custom_call.1
$region0: #{tpu_custom_call.1}
  #allocation0 [shape = 'u32[]', space=smem, size = 0x4, offset = 0x4, fixed_abs, tag = 'smem constant byte address 0x4 - core index']
  #allocation1 [shape = 'u32[144,128]{1,0:T(1,128)}', space=vmem, size = 0x12000, scoped, tag = 'internal scratch']
  #allocation2 [shape = 'f32[8,128]{1,0:T(8,128)}', space=vmem, size = 0x1000, scoped, tag = 'scratch operand']
  %s0 = inlined_call_operand.hbm [shape: f32[4,128], index: 0, kind: input, shape index: {}]
  %s1 = inlined_call_operand.hbm [shape: f32[16,128], index: 1, kind: input, shape index: {}]
  %s2 = inlined_call_operand.hbm [shape: f32[16,128], index: 2, kind: input, shape index: {}]
  %s3 = inlined_call_operand.hbm [shape: f32[1,1], index: 3, kind: output, shape index: {}]
  %s4 = sld [smem:[#allocation0]]
  $region42: #{tpu_custom_call.1} parent=0
    _
  %s6 = ssub.s32 1, %s4
  %s7 = scalar_select 0, %s6, %s4
  $region1: #{tpu_custom_call.1} parent=0
    #allocation3 [shape = 'u8[2048]{0}', space=vmem, size = 0x800, scoped, tag = 'input window, operand 0, single buffered']
    #allocation4 [shape = 's32[1]{0}', space=sflag, size = 0x4, scoped, tag = 'scoped memory for tpu_custom_call.1']
    #allocation5 [shape = 's32[1]{0}', space=sflag, size = 0x4, scoped, tag = 'scoped memory for tpu_custom_call.1']
    #allocation6 [shape = 'u8[8192]{0}', space=vmem, size = 0x2000, scoped, tag = 'input window, operand 1, single buffered']
    #allocation7 [shape = 's32[1]{0}', space=sflag, size = 0x4, scoped, tag = 'scoped memory for tpu_custom_call.1']
    #allocation8 [shape = 'u8[8192]{0}', space=vmem, size = 0x2000, scoped, tag = 'input window, operand 2, single buffered']
    #allocation9 [shape = 'u8[512]{0}', space=smem, size = 0x200, scoped, tag = 'output window, operand 0, single buffered']
    %8 = vsyncpa [#allocation4], 0
    %9 = vsyncpa [#allocation7], 0
    %10 = vsyncpa [#allocation5], 0
    // Predicated region
    $region2: #{tpu_custom_call.1} parent=1 // pred_check
      _
    $region3: #{tpu_custom_call.1} parent=1 // pred_check_branch
      %12 = sbr.rel (0) target = $region5
    $region4: #{tpu_custom_call.1} parent=1 // pred_region
      %s14 = ssub.s32 64, 64
      %15 = vsyncadd [#allocation4], %s14
      %s17 = sshll.u32 [#allocation3], 4
      %s18 = int_to_ptr.vmem [resolvable:$true] %s17
      %20 = dma.hbm_to_vmem [thread:$0]  %s0, 64, %s18, [#allocation4]
    $region5: #{tpu_custom_call.1} parent=1 // pred_fallthru
      _
    // Predicated region
    $region6: #{tpu_custom_call.1} parent=1 // pred_check
      _
    $region7: #{tpu_custom_call.1} parent=1 // pred_check_branch
      %22 = sbr.rel (0) target = $region9
    $region8: #{tpu_custom_call.1} parent=1 // pred_region
      %s23 = sadd.s32 0, 0
      %s24 = smul.u32 2, %s23
      %s26 = ssub.s32 256, 256
      %27 = vsyncadd [#allocation7], %s26
      %s28 = smul.addr %s24, 128
      %s29 = scalar_lea.hbm %s1, %s28
      %s30 = sshll.u32 [#allocation6], 4
      %s31 = int_to_ptr.vmem [resolvable:$true] %s30
      %36 = dma.hbm_to_vmem [thread:$0]  %s29, 256, %s31, [#allocation7], 128, 128, 8
    $region9: #{tpu_custom_call.1} parent=1 // pred_fallthru
      _
    // Predicated region
    $region10: #{tpu_custom_call.1} parent=1 // pred_check
      _
    $region11: #{tpu_custom_call.1} parent=1 // pred_check_branch
      %38 = sbr.rel (0) target = $region13
    $region12: #{tpu_custom_call.1} parent=1 // pred_region
      %s39 = sadd.s32 0, 0
      %s40 = smul.u32 2, %s39
      %s42 = ssub.s32 256, 256
      %43 = vsyncadd [#allocation7], %s42
      %s44 = smul.addr %s40, 128
      %s45 = scalar_lea.hbm %s2, %s44
      %s46 = sshll.u32 [#allocation8], 4
      %s47 = int_to_ptr.vmem [resolvable:$true] %s46
      %52 = dma.hbm_to_vmem [thread:$0]  %s45, 256, %s47, [#allocation7], 128, 128, 8
    $region13: #{tpu_custom_call.1} parent=1 // pred_fallthru
      _
    // Predicated region
    $region14: #{tpu_custom_call.1} parent=1 // pred_check
      _
    $region15: #{tpu_custom_call.1} parent=1 // pred_check_branch
      %54 = sbr.rel (0) target = $region17
    $region16: #{tpu_custom_call.1} parent=1 // pred_region
      %55 = dma.done [#allocation4], 64
    $region17: #{tpu_custom_call.1} parent=1 // pred_fallthru
      _
    // Predicated region
    $region18: #{tpu_custom_call.1} parent=1 // pred_check
      _
    $region19: #{tpu_custom_call.1} parent=1 // pred_check_branch
      %57 = sbr.rel (0) target = $region21
    $region20: #{tpu_custom_call.1} parent=1 // pred_region
      %58 = dma.done [#allocation7], 256
    $region21: #{tpu_custom_call.1} parent=1 // pred_fallthru
      _
    // Predicated region
    $region22: #{tpu_custom_call.1} parent=1 // pred_check
      _
    $region23: #{tpu_custom_call.1} parent=1 // pred_check_branch
      %60 = sbr.rel (0) target = $region25
    $region24: #{tpu_custom_call.1} parent=1 // pred_region
      %61 = dma.done [#allocation7], 256
    $region25: #{tpu_custom_call.1} parent=1 // pred_fallthru
      _
    %s62 = sadd.s32 0, 0
    %s63 = smul.u32 2, %s62
    %s64 = sadd.s32 0, 0
    %s65 = smul.u32 2, %s64
    %p66 = scmp.eq.s32.totalorder 0, 0
    // Predicated region
    $region26: #{tpu_custom_call.1} parent=1 // pred_check
      %p67 = pneg %p66
    $region27: #{tpu_custom_call.1} parent=1 // pred_check_branch
      %69 = sbr.rel (%p67) target = $region29
    $region28: #{tpu_custom_call.1} parent=1 // pred_region
      %70 = vst [vmem:[#allocation2] sm:$0xff] 0.0
    $region29: #{tpu_custom_call.1} parent=1 // pred_fallthru
      _
    %v71 = vld [vmem:[#allocation8] sm:$0xff]
    %v72 = vld [vmem:[#allocation8 + $0x8] sm:$0xff]
    %v73 = vld [vmem:[#allocation6] sm:$0xff]
    %v74 = vld [vmem:[#allocation6 + $0x8] sm:$0xff]
    %v75 = vsub.f32 %v71, %v73
    %v76 = vsub.f32 %v72, %v74
    %v77 = vand.u32 2147483647, %v75
    %v78 = vand.u32 2147483647, %v76
    %v79 = vld [vmem:[#allocation2] sm:$0xff]
    %v80 = vadd.f32 %v77, %v78
    %v81 = vadd.f32 %v79, %v80
    %82 = vst [vmem:[#allocation2] sm:$0xff] %v81
    // Predicated region
    $region30: #{tpu_custom_call.1} parent=1 // pred_check
      %p83 = pneg %p66
    $region31: #{tpu_custom_call.1} parent=1 // pred_check_branch
      %85 = sbr.rel (%p83) target = $region33
    $region32: #{tpu_custom_call.1} parent=1 // pred_region
      %v86 = vld [vmem:[#allocation2] sm:$0xff]
      %87 = vadd.xlane.f32.xlu0 %v86
      %v88 = vpop.xlane.xlu0 %87
      %v89 = vrot.slane %v88, 4
      %v90 = vadd.f32 %v88, %v89
      %v91 = vrot.slane %v90, 2
      %v92 = vadd.f32 %v90, %v91
      %v93 = vrot.slane %v92, 1
      %v94 = vadd.f32 %v92, %v93
      %s95 = vtos %v94
      %s96 = smul.f32 %s95, 0.00048828125
      %s97 = smul.f32 %s96, 10.0
      %s98 = scalar_lea.smem [#allocation9], 0
      %99 = sst [smem:[%s98]] %s97
      %v100 = vld [vmem:[#allocation3] sm:$0xf]
      %v101 = vsub.f32 %v100, 1.0
      %v102 = vmul.f32 %v101, %v101
      %vm103 = vcmask 1043456
      %v104 = vsel %vm103, %v102, 0.0
      %105 = vadd.xlane.f32.xlu0 %v104
      %v106 = vpop.xlane.xlu0 %105
      %v107 = vrot.slane %v106, 4
      %v108 = vadd.f32 %v106, %v107
      %v109 = vrot.slane %v108, 2
      %v110 = vadd.f32 %v108, %v109
      %v111 = vrot.slane %v110, 1
      %v112 = vadd.f32 %v110, %v111
      %s113 = vtos %v112
      %s114 = smul.f32 %s113, 0.001953125
      %s115 = sld [smem:[#allocation9]]
      %s116 = sadd.f32 %s115, %s114
      %117 = sst [smem:[%s98]] %s116
    $region33: #{tpu_custom_call.1} parent=1 // pred_fallthru
      _
    // Predicated region
    $region34: #{tpu_custom_call.1} parent=1 // pred_check
      _
    $region35: #{tpu_custom_call.1} parent=1 // pred_check_branch
      %119 = sbr.rel (0) target = $region37
    $region36: #{tpu_custom_call.1} parent=1 // pred_region
      %s121 = ssub.s32 16, 16
      %122 = vsyncadd [#allocation5], %s121
      %125 = dma.smem_to_hbm [#allocation9], 16, %s3, [#allocation5]
    $region37: #{tpu_custom_call.1} parent=1 // pred_fallthru
      _
    // Predicated region
    $region38: #{tpu_custom_call.1} parent=1 // pred_check
      _
    $region39: #{tpu_custom_call.1} parent=1 // pred_check_branch
      %127 = sbr.rel (0) target = $region41
    $region40: #{tpu_custom_call.1} parent=1 // pred_region
      %128 = dma.done [#allocation5], 16
    $region41: #{tpu_custom_call.1} parent=1 // pred_fallthru
      _
    %129 = sfence
    %130 = vsyncpa [#allocation4], 1
    %131 = vsyncpa [#allocation7], 1
    %132 = vsyncpa [#allocation5], 1

</llo_original>
